<compile_context>
chip_gen: v6e
topology: v6e:2x2x1
jax: 0.10.0
libtpu: 0.0.40
codegen_flags: <defaults>
</compile_context>

<pallas_src>
import functools
import math

import jax
import jax.numpy as jnp
from jax.experimental import pallas as pl
from jax.experimental.pallas import tpu as pltpu


# ---------------------------------------------------------------------------
# Fast path: output = x[:, 0, :] @ Wv^T + bv   (exact for L=1 + is_causal)
# ---------------------------------------------------------------------------
def mha_fast_kernel(x0_ref, wv_ref, bv_ref, o_ref):
    # x0_ref: (B, C); wv_ref: (C, A); bv_ref: (1, A); o_ref: (B, 1, A)
    x0 = x0_ref[...].astype(jnp.float32)                              # (B, C)
    out = jnp.dot(x0, wv_ref[...].astype(jnp.float32),
                  preferred_element_type=jnp.float32)                 # (B, A)
    out = out + bv_ref[...].astype(jnp.float32)
    o_ref[...] = out[:, None, :].astype(o_ref.dtype)                  # (B, 1, A)


# ---------------------------------------------------------------------------
# General path (kept for non-degenerate masks): fused projections, vectorized
# heads, one grid step over the whole batch.
# ---------------------------------------------------------------------------
def mha_general_kernel(x_ref, w_ref, b_ref, o_ref, *, n_head, head_dim):
    # x_ref: (B, T, C); w_ref: (C, 3A) = [Wk^T | Wq^T/sqrt(hd) | Wv^T];
    # b_ref: (1, 3A) (bq pre-scaled); o_ref: (B, 1, A)
    B, T, C = x_ref.shape
    A = n_head * head_dim

    x2d = x_ref[...].reshape(B * T, C).astype(jnp.float32)            # (B*T, C)
    w = w_ref[...].astype(jnp.float32)
    b = b_ref[...].astype(jnp.float32)

    # One fused MXU matmul for all three projections (lane width 3A).
    proj = jnp.dot(x2d, w, preferred_element_type=jnp.float32) + b    # (B*T, 3A)
    proj = proj.reshape(B, T, 3 * A)
    k = proj[:, :, 0 * A:1 * A]                                        # (B, T, A)
    q = proj[:, T - 1:T, 1 * A:2 * A]                                  # (B, 1, A), pre-scaled
    v = proj[:, :, 2 * A:3 * A]                                        # (B, T, A)

    # Per-head scores for all heads at once: contract each head's hd lanes
    # with a one-hot (A, n_head) selector matmul (MXU, no Python head loop).
    lane_h = jax.lax.broadcasted_iota(jnp.int32, (A, n_head), 0) // head_dim
    head_i = jax.lax.broadcasted_iota(jnp.int32, (A, n_head), 1)
    hsel = (lane_h == head_i).astype(jnp.float32)                      # (A, nH)
    s = jnp.dot((k * q).reshape(B * T, A), hsel,
                preferred_element_type=jnp.float32).reshape(B, T, n_head)

    # PyTorch top-left aligned is_causal mask for (L=1, S=T): key 0 only.
    t_idx = jax.lax.broadcasted_iota(jnp.int32, (B, T, n_head), 1)
    s = jnp.where(t_idx == 0, s, -jnp.inf)

    # Softmax over T (a row can never be fully masked here: key 0 is allowed).
    m = jnp.max(s, axis=1, keepdims=True)
    p = jnp.exp(s - m)
    denom = jnp.sum(p, axis=1, keepdims=True)
    p = p * pl.reciprocal(denom, approx=True)                          # (B, T, nH)

    # Broadcast per-head probs back to lane width A and reduce over T.
    head_j = jax.lax.broadcasted_iota(jnp.int32, (n_head, A), 0)
    lane_j = jax.lax.broadcasted_iota(jnp.int32, (n_head, A), 1) // head_dim
    hexp = (head_j == lane_j).astype(jnp.float32)                      # (nH, A)
    p_full = jnp.dot(p.reshape(B * T, n_head), hexp,
                     preferred_element_type=jnp.float32).reshape(B, T, A)
    out = jnp.sum(p_full * v, axis=1)                                  # (B, A)
    o_ref[...] = out[:, None, :].astype(o_ref.dtype)                   # (B, 1, A)


def multi_attention_head(x, params, n_head, *, use_fast_path=True):
    """x: (B, T, C); params = (wk, bk, wq, bq, wv, bv), wk (C, A), bk (1, A)."""
    wk, bk, wq, bq, wv, bv = params
    B, T, C = x.shape
    A = wk.shape[1]
    head_dim = A // n_head

    if use_fast_path:
        # Top-left is_causal mask with L=1 query => softmax is one-hot on key 0.
        # Only x[:, 0, :] is ever needed; slice it in the wrapper so the kernel
        # DMA is O(B*C), not O(B*T*C).
        x0 = x[:, 0, :]                                               # (B, C)
        return pl.pallas_call(
            mha_fast_kernel,
            out_shape=jax.ShapeDtypeStruct((B, 1, A), x.dtype),
            grid=(1,),
            in_specs=[
                pl.BlockSpec((B, C), lambda i: (0, 0)),         # x[:, 0, :]
                pl.BlockSpec((C, A), lambda i: (0, 0)),         # Wv^T
                pl.BlockSpec((1, A), lambda i: (0, 0)),         # bv
            ],
            out_specs=pl.BlockSpec((B, 1, A), lambda i: (0, 0, 0)),
            compiler_params=pltpu.CompilerParams(
                dimension_semantics=("arbitrary",)),
        )(x0, wv, bv)

    # General path: pack [Wk | Wq/sqrt(hd) | Wv] host-side -> one fused matmul.
    scale = 1.0 / math.sqrt(head_dim)
    w_kqv = jnp.concatenate([wk, wq * scale, wv], axis=1)              # (C, 3A)
    b_kqv = jnp.concatenate([bk, bq * scale, bv], axis=1)              # (1, 3A)
    kernel = functools.partial(mha_general_kernel,
                               n_head=n_head, head_dim=head_dim)
    return pl.pallas_call(
        kernel,
        out_shape=jax.ShapeDtypeStruct((B, 1, A), x.dtype),
        grid=(1,),
        in_specs=[
            pl.BlockSpec((B, T, C), lambda i: (0, 0, 0)),       # x (full)
            pl.BlockSpec((C, 3 * A), lambda i: (0, 0)),         # packed W
            pl.BlockSpec((1, 3 * A), lambda i: (0, 0)),         # packed b
        ],
        out_specs=pl.BlockSpec((B, 1, A), lambda i: (0, 0, 0)),
        compiler_params=pltpu.CompilerParams(
            dimension_semantics=("arbitrary",)),
    )(x, w_kqv, b_kqv)


def reference(x, params, n_head):
    """Pure-JAX replica of the PyTorch forward (eval mode)."""
    wk, bk, wq, bq, wv, bv = params
    B, T, C = x.shape
    A = wk.shape[1]
    hd = A // n_head
    k = x @ wk + bk                                          # (B, T, A)
    v = x @ wv + bv
    q = x[:, -1:, :] @ wq + bq                               # (B, 1, A)
    k = k.reshape(B, T, n_head, hd).transpose(0, 2, 1, 3)    # (B, nH, T, hd)
    v = v.reshape(B, T, n_head, hd).transpose(0, 2, 1, 3)
    q = q.reshape(B, 1, n_head, hd).transpose(0, 2, 1, 3)    # (B, nH, 1, hd)
    s = jnp.einsum('bhqd,bhkd->bhqk', q, k) / math.sqrt(hd)
    mask = jnp.tril(jnp.ones((1, T), dtype=bool))            # top-left (L=1)
    s = jnp.where(mask, s, -jnp.inf)
    p = jax.nn.softmax(s, axis=-1)
    y = jnp.einsum('bhqk,bhkd->bhqd', p, v)
    return y.transpose(0, 2, 1, 3).reshape(B, 1, A)


if __name__ == "__main__":
    B, T = 2, 8
    in_dims, attention_dims, n_head, dropout_rate = 32, 32, 4, 0.1

    key = jax.random.PRNGKey(0)
    k0, k1, k2, k3, k4, k5, k6 = jax.random.split(key, 7)
    bound = 1.0 / math.sqrt(in_dims)   # PyTorch nn.Linear default init range

    def unif(k, shape):
        return jax.random.uniform(k, shape, jnp.float32, -bound, bound)

    # nn.Linear stores weight as (out, in); kernel consumes the transpose (C, A).
    wk = unif(k0, (attention_dims, in_dims)).T
    bk = unif(k1, (1, attention_dims))
    wq = unif(k2, (attention_dims, in_dims)).T
    bq = unif(k3, (1, attention_dims))
    wv = unif(k4, (attention_dims, in_dims)).T
    bv = unif(k5, (1, attention_dims))
    params = (wk, bk, wq, bq, wv, bv)

    x = jax.random.normal(k6, (B, T, in_dims), jnp.float32)

    y_ref = reference(x, params, n_head)

    # Fast (default) path: exploits the one-hot softmax collapse.
    y_fast = jax.block_until_ready(multi_attention_head(x, params, n_head))
    assert y_fast.shape == (B, 1, attention_dims)
    assert jnp.allclose(y_fast, y_ref, atol=1e-5, rtol=1e-5), "fast path mismatch"

    # General path (kept for non-degenerate masks): must agree as well.
    y_gen = jax.block_until_ready(
        multi_attention_head(x, params, n_head, use_fast_path=False))
    assert y_gen.shape == (B, 1, attention_dims)
    assert jnp.allclose(y_gen, y_ref, atol=1e-5, rtol=1e-5), "general path mismatch"

    print("KERNEL_OK")
</pallas_src>

<mosaic_0001>
module attributes {stable_mosaic.version = 11 : i64} {
  func.func @mha_fast_kernel(%arg0: i32, %arg1: memref<2x32xf32, #tpu.memory_space<vmem>>, %arg2: memref<32x32xf32, #tpu.memory_space<vmem>>, %arg3: memref<1x32xf32, #tpu.memory_space<vmem>>, %arg4: memref<2x1x32xf32, #tpu.memory_space<vmem>>) attributes {dimension_semantics = [#tpu.dimension_semantics<arbitrary>], iteration_bounds = array<i64: 1>, scalar_prefetch = 0 : i64, scratch_operands = 0 : i64, tpu.core_type = #tpu.core_type<tc>, window_params = [{pipeline_mode = #tpu.pipeline_mode<synchronous>, transform_indices = @transform_0, window_bounds = array<i64: 2, 32>}, {pipeline_mode = #tpu.pipeline_mode<synchronous>, transform_indices = @transform_1, window_bounds = array<i64: 32, 32>}, {pipeline_mode = #tpu.pipeline_mode<synchronous>, transform_indices = @transform_2, window_bounds = array<i64: 1, 32>}, {pipeline_mode = #tpu.pipeline_mode<synchronous>, transform_indices = @transform_3, window_bounds = array<i64: 2, 1, 32>}]} {
    %c0 = arith.constant 0 : index
    %c0_0 = arith.constant 0 : index
    %0 = vector.load %arg1[%c0, %c0_0] : memref<2x32xf32, #tpu.memory_space<vmem>>, vector<2x32xf32>
    %c0_1 = arith.constant 0 : index
    %c0_2 = arith.constant 0 : index
    %1 = vector.load %arg2[%c0_1, %c0_2] : memref<32x32xf32, #tpu.memory_space<vmem>>, vector<32x32xf32>
    %cst = arith.constant dense<0.000000e+00> : vector<2x32xf32>
    %2 = tpu.matmul %0, %1, %cst {dimension_numbers = #tpu.dot_dimension_numbers<[1], [0], [0], [1], [0, 0, 1, 1], [], []>} : vector<2x32xf32>, vector<32x32xf32>, vector<2x32xf32> -> vector<2x32xf32>
    %c0_3 = arith.constant 0 : index
    %c0_4 = arith.constant 0 : index
    %3 = vector.load %arg3[%c0_3, %c0_4] : memref<1x32xf32, #tpu.memory_space<vmem>>, vector<1x32xf32>
    %4 = vector.broadcast %3 : vector<1x32xf32> to vector<2x32xf32>
    %5 = arith.addf %2, %4 : vector<2x32xf32>
    %6 = vector.shape_cast %5 : vector<2x32xf32> to vector<2x1x32xf32>
    %c0_5 = arith.constant 0 : index
    %c0_6 = arith.constant 0 : index
    %c0_7 = arith.constant 0 : index
    %7 = vector.load %arg4[%c0_5, %c0_6, %c0_7] : memref<2x1x32xf32, #tpu.memory_space<vmem>>, vector<2x1x32xf32>
    tpu.vector_store %arg4[%c0_5, %c0_6, %c0_7], %6 {strides = array<i32>} : memref<2x1x32xf32, #tpu.memory_space<vmem>>, vector<2x1x32xf32>,
    return
  }
  func.func @transform_0(%arg0: i32) -> (i32, i32) {
    %c0_i32 = arith.constant 0 : i32
    %c0_i32_0 = arith.constant 0 : i32
    %c0_i32_1 = arith.constant 0 : i32
    return %c0_i32, %c0_i32_0 : i32, i32
  }
  func.func @transform_1(%arg0: i32) -> (i32, i32) {
    %c0_i32 = arith.constant 0 : i32
    %c0_i32_0 = arith.constant 0 : i32
    %c0_i32_1 = arith.constant 0 : i32
    return %c0_i32, %c0_i32_0 : i32, i32
  }
  func.func @transform_2(%arg0: i32) -> (i32, i32) {
    %c0_i32 = arith.constant 0 : i32
    %c0_i32_0 = arith.constant 0 : i32
    %c0_i32_1 = arith.constant 0 : i32
    return %c0_i32, %c0_i32_0 : i32, i32
  }
  func.func @transform_3(%arg0: i32) -> (i32, i32, i32) {
    %c0_i32 = arith.constant 0 : i32
    %c0_i32_0 = arith.constant 0 : i32
    %c0_i32_1 = arith.constant 0 : i32
    %c0_i32_2 = arith.constant 0 : i32
    return %c0_i32, %c0_i32_0, %c0_i32_1 : i32, i32, i32
  }
}

</mosaic_0001>

<llo_original>
// kernel: tpu_custom_call.1
$region0: #{tpu_custom_call.1}
  #allocation0 [shape = 'u32[]', space=smem, size = 0x4, offset = 0x4, fixed_abs, tag = 'smem constant byte address 0x4 - core index']
  #allocation1 [shape = 'u32[144,128]{1,0:T(1,128)}', space=vmem, size = 0x12000, scoped, tag = 'internal scratch']
  %s0 = inlined_call_operand.hbm [shape: f32[2,32], index: 0, kind: input, shape index: {}]
  %s1 = inlined_call_operand.hbm [shape: f32[32,32], index: 1, kind: input, shape index: {}]
  %s2 = inlined_call_operand.vmem [shape: f32[1,32], index: 2, kind: input, shape index: {}]
  %s3 = inlined_call_operand.hbm [shape: f32[2,1,32], index: 3, kind: output, shape index: {}]
  %s4 = sld [smem:[#allocation0]]
  $region30: #{tpu_custom_call.1} parent=0
    _
  %s6 = ssub.s32 1, %s4
  %s7 = scalar_select 0, %s6, %s4
  $region1: #{tpu_custom_call.1} parent=0
    #allocation2 [shape = 'u8[1024]{0}', space=vmem, size = 0x400, scoped, tag = 'input window, operand 0, single buffered']
    #allocation3 [shape = 's32[1]{0}', space=sflag, size = 0x4, scoped, tag = 'scoped memory for tpu_custom_call.1']
    #allocation4 [shape = 's32[1]{0}', space=sflag, size = 0x4, scoped, tag = 'scoped memory for tpu_custom_call.1']
    #allocation5 [shape = 'u8[16384]{0}', space=vmem, size = 0x4000, scoped, tag = 'input window, operand 1, single buffered']
    #allocation6 [shape = 's32[1]{0}', space=sflag, size = 0x4, scoped, tag = 'scoped memory for tpu_custom_call.1']
    #allocation7 [shape = 'u8[1024]{0}', space=vmem, size = 0x400, scoped, tag = 'output window, operand 0, single buffered']
    %8 = vsyncpa [#allocation3], 0
    %9 = vsyncpa [#allocation6], 0
    %10 = vsyncpa [#allocation4], 0
    // Predicated region
    $region2: #{tpu_custom_call.1} parent=1 // pred_check
      _
    $region3: #{tpu_custom_call.1} parent=1 // pred_check_branch
      %12 = sbr.rel (0) target = $region5
    $region4: #{tpu_custom_call.1} parent=1 // pred_region
      %s14 = ssub.s32 32, 32
      %15 = vsyncadd [#allocation3], %s14
      %s17 = sshll.u32 [#allocation2], 4
      %s18 = int_to_ptr.vmem [resolvable:$true] %s17
      %20 = dma.hbm_to_vmem [thread:$0]  %s0, 32, %s18, [#allocation3]
    $region5: #{tpu_custom_call.1} parent=1 // pred_fallthru
      _
    // Predicated region
    $region6: #{tpu_custom_call.1} parent=1 // pred_check
      _
    $region7: #{tpu_custom_call.1} parent=1 // pred_check_branch
      %22 = sbr.rel (0) target = $region9
    $region8: #{tpu_custom_call.1} parent=1 // pred_region
      %s24 = ssub.s32 512, 512
      %25 = vsyncadd [#allocation6], %s24
      %s26 = sshll.u32 [#allocation5], 4
      %s27 = int_to_ptr.vmem [resolvable:$true] %s26
      %32 = dma.hbm_to_vmem [thread:$0]  %s1, 512, %s27, [#allocation6], 128, 128, 8
    $region9: #{tpu_custom_call.1} parent=1 // pred_fallthru
      _
    // Predicated region
    $region10: #{tpu_custom_call.1} parent=1 // pred_check
      _
    $region11: #{tpu_custom_call.1} parent=1 // pred_check_branch
      %34 = sbr.rel (0) target = $region13
    $region12: #{tpu_custom_call.1} parent=1 // pred_region
      _
    $region13: #{tpu_custom_call.1} parent=1 // pred_fallthru
      _
    // Predicated region
    $region14: #{tpu_custom_call.1} parent=1 // pred_check
      _
    $region15: #{tpu_custom_call.1} parent=1 // pred_check_branch
      %36 = sbr.rel (0) target = $region17
    $region16: #{tpu_custom_call.1} parent=1 // pred_region
      %37 = dma.done [#allocation3], 32
    $region17: #{tpu_custom_call.1} parent=1 // pred_fallthru
      _
    // Predicated region
    $region18: #{tpu_custom_call.1} parent=1 // pred_check
      _
    $region19: #{tpu_custom_call.1} parent=1 // pred_check_branch
      %39 = sbr.rel (0) target = $region21
    $region20: #{tpu_custom_call.1} parent=1 // pred_region
      %40 = dma.done [#allocation6], 512
    $region21: #{tpu_custom_call.1} parent=1 // pred_fallthru
      _
    %v41 = vld [vmem:[#allocation2] sm:$0x3]
    %v42 = vld [vmem:[#allocation5] sm:$0xff]
    %v43 = vld [vmem:[#allocation5 + $0x8] sm:$0xff]
    %v44 = vld [vmem:[#allocation5 + $0x10] sm:$0xff]
    %v45 = vld [vmem:[#allocation5 + $0x18] sm:$0xff]
    %v46 = vld [vmem:[%s2] sm:$0x1]
    %v48 = vlaneseq
    %v49 = vshrl.u32 %v48, 7
    %v50 = vsub.s32 0, %v49
    %v51 = vrot.slane %v46, %v50
    %vm53 = vcmask 261120
    %v55 = vsel %vm53, %v41, 0
    %57 = vmatprep.subr.mxu0 0.0
    %58 = vmatpush1.msra.mxu0 0.0
    %59 = vmatprep.subr.mxu0 0.0
    %60 = vmatpush1.msra.mxu0 0.0
    %61 = vmatprep.subr.mxu0 0.0
    %62 = vmatpush1.msra.mxu0 0.0
    %63 = vmatprep.subr.mxu0 0.0
    %64 = vmatpush1.msra.mxu0 0.0
    %65 = vmatprep.subr.mxu0 0.0
    %66 = vmatpush1.msra.mxu0 0.0
    %67 = vmatprep.subr.mxu0 0.0
    %68 = vmatpush1.msra.mxu0 0.0
    %69 = vmatprep.subr.mxu0 0.0
    %70 = vmatpush1.msra.mxu0 0.0
    %71 = vmatprep.subr.mxu0 0.0
    %72 = vmatpush1.msra.mxu0 0.0
    %73 = vmatprep.subr.mxu0 0.0
    %74 = vmatpush1.msra.mxu0 0.0
    %75 = vmatprep.subr.mxu0 0.0
    %76 = vmatpush1.msra.mxu0 0.0
    %77 = vmatprep.subr.mxu0 0.0
    %78 = vmatpush1.msra.mxu0 0.0
    %79 = vmatprep.subr.mxu0 0.0
    %80 = vmatpush1.msra.mxu0 0.0
    %81 = vmatprep.subr.mxu0 0.0
    %82 = vmatpush1.msra.mxu0 %v45
    %83 = vmatprep.subr.mxu0 0.0
    %84 = vmatpush1.msra.mxu0 %v44
    %85 = vmatprep.subr.mxu0 0.0
    %86 = vmatpush1.msra.mxu0 %v43
    %87 = vmatprep.subr.mxu0 0.0
    %88 = vmatpush1.msra.mxu0 %v42
    %89 = vmatprep.subr.mxu0 0.0
    %90 = vmatpush2.msra.mxu0 0.0
    %91 = vmatprep.subr.mxu0 0.0
    %92 = vmatpush2.msra.mxu0 0.0
    %93 = vmatprep.subr.mxu0 0.0
    %94 = vmatpush2.msra.mxu0 0.0
    %95 = vmatprep.subr.mxu0 0.0
    %96 = vmatpush2.msra.mxu0 0.0
    %97 = vmatprep.subr.mxu0 0.0
    %98 = vmatpush2.msra.mxu0 0.0
    %99 = vmatprep.subr.mxu0 0.0
    %100 = vmatpush2.msra.mxu0 0.0
    %101 = vmatprep.subr.mxu0 0.0
    %102 = vmatpush2.msra.mxu0 0.0
    %103 = vmatprep.subr.mxu0 0.0
    %104 = vmatpush2.msra.mxu0 0.0
    %105 = vmatprep.subr.mxu0 0.0
    %106 = vmatpush2.msra.mxu0 0.0
    %107 = vmatprep.subr.mxu0 0.0
    %108 = vmatpush2.msra.mxu0 0.0
    %109 = vmatprep.subr.mxu0 0.0
    %110 = vmatpush2.msra.mxu0 0.0
    %111 = vmatprep.subr.mxu0 0.0
    %112 = vmatpush2.msra.mxu0 0.0
    %113 = vmatprep.subr.mxu0 0.0
    %114 = vmatpush2.msra.mxu0 0.0
    %115 = vmatprep.subr.mxu0 0.0
    %116 = vmatpush2.msra.mxu0 0.0
    %117 = vmatprep.subr.mxu0 0.0
    %118 = vmatpush2.msra.mxu0 0.0
    %119 = vmatprep.subr.mxu0 0.0
    %120 = vmatpush2.msra.mxu0 0.0
    %121 = vmatprep.mubr.f32.mxu0 0.0
    %122 = vmatmul.mubr.f32.gmra.mxu0 %v55
    %v123 = vpop.f32.mrf.mxu0
    %v124 = vadd.f32 %v51, %v123
    %v125 = vpop.f32.mrf.mxu0
    %126 = vdwg.mxu0
    %v129 = vunpack.c.l.s4 1966171168
    %v130 = vunpack.c.0.s8 %v129
    %v131 = vlaneseq
    %v132 = vshrl.u32 %v131, 7
    %v133 = vsub.s32 %v130, %v132
    %v134 = vrot.slane %v124, %v133
    %v135 = vcombine.high %v134, %v134
    %v137 = vunpack.c.l.s4 1966171168
    %v138 = vunpack.c.0.s8 %v137
    %v139 = vlaneseq
    %v140 = vshrl.u32 %v139, 7
    %v141 = vsub.s32 %v138, %v140
    %v142 = vrot.slane %v134, %v141
    %v144 = vunpack.c.l.s4 1966171168
    %v145 = vunpack.c.0.s8 %v144
    %v146 = vlaneseq
    %v147 = vshrl.u32 %v146, 7
    %v148 = vsub.s32 %v145, %v147
    %v149 = vrot.slane %v135, %v148
    %vm152 = vcmask 253952
    %153 = vst.msk [vmem:[#allocation7] sm:$0x1] %vm152, %v142
    %154 = vst.msk [vmem:[#allocation7 + $0x1] sm:$0x1] %vm152, %v149
    // Predicated region
    $region22: #{tpu_custom_call.1} parent=1 // pred_check
      _
    $region23: #{tpu_custom_call.1} parent=1 // pred_check_branch
      %156 = sbr.rel (0) target = $region25
    $region24: #{tpu_custom_call.1} parent=1 // pred_region
      %s158 = ssub.s32 32, 32
      %159 = vsyncadd [#allocation4], %s158
      %s160 = sshll.u32 [#allocation7], 4
      %s161 = int_to_ptr.vmem [resolvable:$true] %s160
      %166 = dma.vmem_to_hbm [thread:$0]  %s161, 32, %s3, [#allocation4], 16, 16, 1
    $region25: #{tpu_custom_call.1} parent=1 // pred_fallthru
      _
    // Predicated region
    $region26: #{tpu_custom_call.1} parent=1 // pred_check
      _
    $region27: #{tpu_custom_call.1} parent=1 // pred_check_branch
      %168 = sbr.rel (0) target = $region29
    $region28: #{tpu_custom_call.1} parent=1 // pred_region
      %169 = dma.done [#allocation4], 32
    $region29: #{tpu_custom_call.1} parent=1 // pred_fallthru
      _
    %170 = vsyncpa [#allocation3], 1
    %171 = vsyncpa [#allocation6], 1
    %172 = vsyncpa [#allocation4], 1

</llo_original>
